<compile_context>
chip_gen: v7x
topology: tpu7x:2x2x1
jax: 0.10.0
libtpu: 0.0.40
codegen_flags: <defaults>
</compile_context>

<pallas_src>
import jax
import jax.numpy as jnp
from jax.experimental import pallas as pl
from jax.experimental.pallas import tpu as pltpu

LANE = 128


def _round_up(x, m):
    return ((x + m - 1) // m) * m


def _gru_seq_kernel(tok_ref,    # SMEM, (T,) int32 -- scalar prefetch (used in index_maps)
                    emb_ref,    # VMEM, (1, 1, Hp)  embedding row for this step's token
                    h0_ref,     # VMEM, (1, Hp)     initial hidden (resident)
                    w_ref,      # VMEM, (2Hp, 4Hp)  fused GRU weights (resident)
                    b_ref,      # VMEM, (1, 4Hp)    fused biases (resident)
                    out_ref,    # VMEM, (1, 1, Hp)  per-step hidden output
                    h_scratch): # VMEM, (1, Hp)     hidden-state accumulator
    Hp = h_scratch.shape[-1]
    t = pl.program_id(0)

    @pl.when(t == 0)
    def _():
        h_scratch[...] = h0_ref[...]

    x = emb_ref[0]                 # (1, Hp)
    h = h_scratch[...]             # (1, Hp)

    xh = jnp.concatenate([x, h], axis=-1)                       # (1, 2Hp)
    g = jnp.dot(xh, w_ref[...], preferred_element_type=jnp.float32) + b_ref[...]

    r = jax.nn.sigmoid(g[:, 0:Hp])
    z = jax.nn.sigmoid(g[:, Hp:2 * Hp])
    n = jnp.tanh(g[:, 2 * Hp:3 * Hp] + r * g[:, 3 * Hp:4 * Hp])
    h_new = (1.0 - z) * n + z * h

    h_scratch[...] = h_new
    out_ref[0] = h_new


def pack_params(params):
    """Build padded, fused, lane-aligned kernel operands from PyTorch-layout params."""
    emb = params["embedding"]               # (V, H)
    w_ih_t = params["w_ih_t"]               # (H, 3H), gate order r, z, n
    w_hh_t = params["w_hh_t"]               # (H, 3H)
    b_ih = params["b_ih"].reshape(-1)       # (3H,)
    b_hh = params["b_hh"].reshape(-1)       # (3H,)

    V, H = emb.shape
    Hp = _round_up(max(H, LANE), LANE)

    # Embedding rows padded to Hp lanes; singleton middle dim so the per-token
    # block (1, 1, Hp) trivially satisfies the (8, 128) BlockSpec constraint.
    emb_pad = jnp.zeros((V, 1, Hp), jnp.float32).at[:, 0, :H].set(emb)

    # Fused weight: rows [0:Hp] = x contribution, rows [Hp:2Hp] = h contribution.
    w_cat = jnp.zeros((2 * Hp, 4 * Hp), jnp.float32)
    # r gate
    w_cat = w_cat.at[0:H, 0:H].set(w_ih_t[:, 0:H])
    w_cat = w_cat.at[Hp:Hp + H, 0:H].set(w_hh_t[:, 0:H])
    # z gate
    w_cat = w_cat.at[0:H, Hp:Hp + H].set(w_ih_t[:, H:2 * H])
    w_cat = w_cat.at[Hp:Hp + H, Hp:Hp + H].set(w_hh_t[:, H:2 * H])
    # n gate, input part (x only)
    w_cat = w_cat.at[0:H, 2 * Hp:2 * Hp + H].set(w_ih_t[:, 2 * H:3 * H])
    # n gate, hidden part (h only)
    w_cat = w_cat.at[Hp:Hp + H, 3 * Hp:3 * Hp + H].set(w_hh_t[:, 2 * H:3 * H])

    b_cat = jnp.zeros((1, 4 * Hp), jnp.float32)
    b_cat = b_cat.at[0, 0:H].set(b_ih[0:H] + b_hh[0:H])                    # r
    b_cat = b_cat.at[0, Hp:Hp + H].set(b_ih[H:2 * H] + b_hh[H:2 * H])      # z
    b_cat = b_cat.at[0, 2 * Hp:2 * Hp + H].set(b_ih[2 * H:3 * H])          # n (input)
    b_cat = b_cat.at[0, 3 * Hp:3 * Hp + H].set(b_hh[2 * H:3 * H])          # n (hidden)

    return {"emb_pad": emb_pad, "w_cat": w_cat, "b_cat": b_cat, "H": H}


def encoder_rnn_forward(tokens, hidden, packed):
    """tokens: int32 [T]; hidden: f32 [1, 1, H].
    Returns (output [T, 1, H], hidden [1, 1, H]). With T == 1 this is exactly
    the PyTorch EncoderRNN.forward single-step semantics."""
    emb_pad = packed["emb_pad"]      # (V, 1, Hp)
    w_cat = packed["w_cat"]          # (2Hp, 4Hp)
    b_cat = packed["b_cat"]          # (1, 4Hp)
    H = packed["H"]
    V, _, Hp = emb_pad.shape
    T = tokens.shape[0]

    # Clamp token ids: an OOB block index would silently read garbage on HW.
    tok = jnp.clip(tokens.astype(jnp.int32), 0, V - 1)

    h0 = jnp.zeros((1, Hp), jnp.float32).at[:, :H].set(hidden.reshape(1, H))

    # VMEM budget (f32 bytes): double-buffered pipeline blocks + scratch.
    vmem_bytes = 4 * (2 * Hp                      # embedding row (x2 buffers)
                      + 2 * (2 * Hp * 4 * Hp)     # fused weights
                      + 2 * (4 * Hp)              # fused bias
                      + 2 * Hp                    # h0
                      + 2 * Hp                    # output block
                      + Hp)                       # hidden scratch
    vmem_limit = max(4 * vmem_bytes, 16 << 20)    # headroom; << 64 MiB (v7x)

    out = pl.pallas_call(
        _gru_seq_kernel,
        out_shape=jax.ShapeDtypeStruct((T, 1, Hp), jnp.float32),
        grid_spec=pltpu.PrefetchScalarGridSpec(
            num_scalar_prefetch=1,
            grid=(T,),
            in_specs=[
                # One embedding row per step, selected by the prefetched token.
                pl.BlockSpec((1, 1, Hp), lambda t, tref: (tref[t], 0, 0)),
                # Resident operands: constant block index -> fetched once.
                pl.BlockSpec((1, Hp), lambda t, tref: (0, 0)),
                pl.BlockSpec((2 * Hp, 4 * Hp), lambda t, tref: (0, 0)),
                pl.BlockSpec((1, 4 * Hp), lambda t, tref: (0, 0)),
            ],
            out_specs=pl.BlockSpec((1, 1, Hp), lambda t, tref: (t, 0, 0)),
            scratch_shapes=[pltpu.VMEM((1, Hp), jnp.float32)],
        ),
        compiler_params=pltpu.CompilerParams(
            dimension_semantics=("arbitrary",),   # time axis is serial
            vmem_limit_bytes=int(vmem_limit)),
    )(tok, emb_pad, h0, w_cat, b_cat)

    outputs = out[:, :, :H]                       # (T, 1, H)
    hidden_out = outputs[-1].reshape(1, 1, H)
    return outputs, hidden_out


def _reference_forward(tokens, hidden, params):
    """Pure-JAX reference of PyTorch nn.GRU over a token sequence (gates r,z,n)."""
    emb = params["embedding"]
    H = emb.shape[1]
    h = hidden.reshape(1, H)
    outs = []
    for t in range(tokens.shape[0]):
        x = emb[tokens[t]][None, :]
        gi = x @ params["w_ih_t"] + params["b_ih"]
        gh = h @ params["w_hh_t"] + params["b_hh"]
        ir, iz, in_ = gi[:, :H], gi[:, H:2 * H], gi[:, 2 * H:]
        hr, hz, hn = gh[:, :H], gh[:, H:2 * H], gh[:, 2 * H:]
        r = jax.nn.sigmoid(ir + hr)
        z = jax.nn.sigmoid(iz + hz)
        n = jnp.tanh(in_ + r * hn)
        h = (1.0 - z) * n + z * h
        outs.append(h)
    return jnp.stack(outs, axis=0), h.reshape(1, 1, H)


def init_params(key, input_size, hidden_size):
    """Deterministic synthetic parameter init (PyTorch-style uniform bounds)."""
    k = jax.random.split(key, 5)
    H = hidden_size
    bound = 1.0 / jnp.sqrt(jnp.float32(H))
    return {
        # nn.Embedding default init: N(0, 1)
        "embedding": jax.random.normal(k[0], (input_size, H), jnp.float32),
        # nn.GRU weights: U(-1/sqrt(H), 1/sqrt(H)); stored transposed [H, 3H]
        "w_ih_t": jax.random.uniform(k[1], (H, 3 * H), jnp.float32, -bound, bound),
        "w_hh_t": jax.random.uniform(k[2], (H, 3 * H), jnp.float32, -bound, bound),
        "b_ih": jax.random.uniform(k[3], (1, 3 * H), jnp.float32, -bound, bound),
        "b_hh": jax.random.uniform(k[4], (1, 3 * H), jnp.float32, -bound, bound),
    }


if __name__ == "__main__":
    vocab_size = 16      # input_size (word vocab size)
    hidden_size = 32

    key = jax.random.PRNGKey(0)
    pkey, tkey1, tkey2 = jax.random.split(key, 3)
    params = init_params(pkey, vocab_size, hidden_size)
    packed = pack_params(params)

    hidden0 = jnp.zeros((1, 1, hidden_size), jnp.float32)   # initHidden()

    # --- single-step call: exactly the PyTorch module's forward(input, hidden) ---
    token = jax.random.randint(tkey1, (1,), 0, vocab_size, dtype=jnp.int32)
    out1, hid1 = encoder_rnn_forward(token, hidden0, packed)
    out1 = jax.block_until_ready(out1)
    hid1 = jax.block_until_ready(hid1)
    ref_out1, ref_hid1 = _reference_forward(token, hidden0, params)
    assert out1.shape == (1, 1, hidden_size)
    assert hid1.shape == (1, 1, hidden_size)
    assert jnp.allclose(out1, ref_out1, atol=1e-5, rtol=1e-5)
    assert jnp.allclose(hid1, ref_hid1, atol=1e-5, rtol=1e-5)

    # --- full-sequence call: whole sentence in one pallas_call (amortized) ---
    seq_len = 8
    tokens = jax.random.randint(tkey2, (seq_len,), 0, vocab_size, dtype=jnp.int32)
    out_seq, hid_seq = encoder_rnn_forward(tokens, hidden0, packed)
    out_seq = jax.block_until_ready(out_seq)
    hid_seq = jax.block_until_ready(hid_seq)
    ref_out_seq, ref_hid_seq = _reference_forward(tokens, hidden0, params)
    assert out_seq.shape == (seq_len, 1, hidden_size)
    assert hid_seq.shape == (1, 1, hidden_size)
    assert jnp.allclose(out_seq, ref_out_seq, atol=1e-5, rtol=1e-5)
    assert jnp.allclose(hid_seq, ref_hid_seq, atol=1e-5, rtol=1e-5)

    print("KERNEL_OK")
</pallas_src>

<mosaic_0001>
module attributes {stable_mosaic.version = 11 : i64} {
  func.func @_gru_seq_kernel(%arg0: i32, %arg1: memref<1xi32, #tpu.memory_space<smem>>, %arg2: memref<1x1x128xf32, #tpu.memory_space<vmem>>, %arg3: memref<1x128xf32, #tpu.memory_space<vmem>>, %arg4: memref<256x512xf32, #tpu.memory_space<vmem>>, %arg5: memref<1x512xf32, #tpu.memory_space<vmem>>, %arg6: memref<1x1x128xf32, #tpu.memory_space<vmem>>, %arg7: memref<1x128xf32, #tpu.memory_space<vmem>>) attributes {dimension_semantics = [#tpu.dimension_semantics<arbitrary>], iteration_bounds = array<i64: 1>, scalar_prefetch = 1 : i64, scratch_operands = 1 : i64, tpu.core_type = #tpu.core_type<tc>, window_params = [{transform_indices = @transform_0, window_bounds = array<i64: 1, 1, 128>}, {pipeline_mode = #tpu.pipeline_mode<synchronous>, transform_indices = @transform_1, window_bounds = array<i64: 1, 128>}, {pipeline_mode = #tpu.pipeline_mode<synchronous>, transform_indices = @transform_2, window_bounds = array<i64: 256, 512>}, {pipeline_mode = #tpu.pipeline_mode<synchronous>, transform_indices = @transform_3, window_bounds = array<i64: 1, 512>}, {transform_indices = @transform_4, window_bounds = array<i64: 1, 1, 128>}]} {
    %c0_i32 = arith.constant 0 : i32
    %0 = arith.cmpi eq, %arg0, %c0_i32 : i32
    %1 = arith.extui %0 : i1 to i32
    %c0_i32_0 = arith.constant 0 : i32
    %2 = arith.cmpi ne, %1, %c0_i32_0 : i32
    scf.if %2 {
      %c0_17 = arith.constant 0 : index
      %c0_18 = arith.constant 0 : index
      %37 = vector.load %arg3[%c0_17, %c0_18] : memref<1x128xf32, #tpu.memory_space<vmem>>, vector<1x128xf32>
      %c0_19 = arith.constant 0 : index
      %c0_20 = arith.constant 0 : index
      %38 = vector.load %arg7[%c0_19, %c0_20] : memref<1x128xf32, #tpu.memory_space<vmem>>, vector<1x128xf32>
      tpu.vector_store %arg7[%c0_19, %c0_20], %37 {strides = array<i32>} : memref<1x128xf32, #tpu.memory_space<vmem>>, vector<1x128xf32>,
    } else {
    }
    %c0 = arith.constant 0 : index
    %c0_1 = arith.constant 0 : index
    %c0_2 = arith.constant 0 : index
    %3 = vector.load %arg2[%c0, %c0_1, %c0_2] : memref<1x1x128xf32, #tpu.memory_space<vmem>>, vector<1x1x128xf32>
    %4 = vector.shape_cast %3 : vector<1x1x128xf32> to vector<1x128xf32>
    %c0_3 = arith.constant 0 : index
    %c0_4 = arith.constant 0 : index
    %5 = vector.load %arg7[%c0_3, %c0_4] : memref<1x128xf32, #tpu.memory_space<vmem>>, vector<1x128xf32>
    %6 = tpu.concatenate %4, %5 in 1 : vector<1x128xf32>, vector<1x128xf32> -> vector<1x256xf32>
    %c0_5 = arith.constant 0 : index
    %c0_6 = arith.constant 0 : index
    %7 = vector.load %arg4[%c0_5, %c0_6] : memref<256x512xf32, #tpu.memory_space<vmem>>, vector<256x512xf32>
    %cst = arith.constant dense<0.000000e+00> : vector<1x512xf32>
    %8 = tpu.matmul %6, %7, %cst {dimension_numbers = #tpu.dot_dimension_numbers<[1], [0], [0], [1], [0, 0, 1, 1], [], []>} : vector<1x256xf32>, vector<256x512xf32>, vector<1x512xf32> -> vector<1x512xf32>
    %c0_7 = arith.constant 0 : index
    %c0_8 = arith.constant 0 : index
    %9 = vector.load %arg5[%c0_7, %c0_8] : memref<1x512xf32, #tpu.memory_space<vmem>>, vector<1x512xf32>
    %10 = arith.addf %8, %9 : vector<1x512xf32>
    %11 = vector.extract_strided_slice %10 {offsets = [0, 0], sizes = [1, 128], strides = [1, 1]} : vector<1x512xf32> to vector<1x128xf32>
    %12 = arith.negf %11 : vector<1x128xf32>
    %13 = math.exp %12 : vector<1x128xf32>
    %cst_9 = arith.constant 1.000000e+00 : f32
    %14 = vector.broadcast %cst_9 : f32 to vector<1x128xf32>
    %15 = arith.addf %14, %13 : vector<1x128xf32>
    %16 = arith.divf %14, %15 : vector<1x128xf32>
    %17 = vector.extract_strided_slice %10 {offsets = [0, 128], sizes = [1, 128], strides = [1, 1]} : vector<1x512xf32> to vector<1x128xf32>
    %18 = arith.negf %17 : vector<1x128xf32>
    %19 = math.exp %18 : vector<1x128xf32>
    %cst_10 = arith.constant 1.000000e+00 : f32
    %20 = vector.broadcast %cst_10 : f32 to vector<1x128xf32>
    %21 = arith.addf %20, %19 : vector<1x128xf32>
    %22 = arith.divf %20, %21 : vector<1x128xf32>
    %23 = vector.extract_strided_slice %10 {offsets = [0, 256], sizes = [1, 128], strides = [1, 1]} : vector<1x512xf32> to vector<1x128xf32>
    %24 = vector.extract_strided_slice %10 {offsets = [0, 384], sizes = [1, 128], strides = [1, 1]} : vector<1x512xf32> to vector<1x128xf32>
    %25 = arith.mulf %16, %24 : vector<1x128xf32>
    %26 = arith.addf %23, %25 : vector<1x128xf32>
    %27 = math.tanh %26 : vector<1x128xf32>
    %cst_11 = arith.constant 1.000000e+00 : f32
    %28 = vector.broadcast %cst_11 : f32 to vector<1x128xf32>
    %29 = arith.subf %28, %22 : vector<1x128xf32>
    %30 = arith.mulf %29, %27 : vector<1x128xf32>
    %31 = arith.mulf %22, %5 : vector<1x128xf32>
    %32 = arith.addf %30, %31 : vector<1x128xf32>
    %c0_12 = arith.constant 0 : index
    %c0_13 = arith.constant 0 : index
    %33 = vector.load %arg7[%c0_12, %c0_13] : memref<1x128xf32, #tpu.memory_space<vmem>>, vector<1x128xf32>
    tpu.vector_store %arg7[%c0_12, %c0_13], %32 {strides = array<i32>} : memref<1x128xf32, #tpu.memory_space<vmem>>, vector<1x128xf32>,
    %c0_14 = arith.constant 0 : index
    %c0_15 = arith.constant 0 : index
    %c0_16 = arith.constant 0 : index
    %34 = vector.load %arg6[%c0_14, %c0_15, %c0_16] : memref<1x1x128xf32, #tpu.memory_space<vmem>>, vector<1x1x128xf32>
    %35 = vector.shape_cast %34 : vector<1x1x128xf32> to vector<1x128xf32>
    %36 = vector.shape_cast %32 : vector<1x128xf32> to vector<1x1x128xf32>
    tpu.vector_store %arg6[%c0_14, %c0_15, %c0_16], %36 {strides = array<i32>} : memref<1x1x128xf32, #tpu.memory_space<vmem>>, vector<1x1x128xf32>,
    return
  }
  func.func @transform_0(%arg0: i32, %arg1: memref<1xi32, #tpu.memory_space<smem>>) -> (i32, i32, i32) {
    %0 = arith.index_cast %arg0 : i32 to index
    %1 = memref.load %arg1[%0] : memref<1xi32, #tpu.memory_space<smem>>
    %c0_i32 = arith.constant 0 : i32
    %c0_i32_0 = arith.constant 0 : i32
    %c0_i32_1 = arith.constant 0 : i32
    return %1, %c0_i32, %c0_i32_0 : i32, i32, i32
  }
  func.func @transform_1(%arg0: i32, %arg1: memref<1xi32, #tpu.memory_space<smem>>) -> (i32, i32) {
    %c0_i32 = arith.constant 0 : i32
    %c0_i32_0 = arith.constant 0 : i32
    %c0_i32_1 = arith.constant 0 : i32
    return %c0_i32, %c0_i32_0 : i32, i32
  }
  func.func @transform_2(%arg0: i32, %arg1: memref<1xi32, #tpu.memory_space<smem>>) -> (i32, i32) {
    %c0_i32 = arith.constant 0 : i32
    %c0_i32_0 = arith.constant 0 : i32
    %c0_i32_1 = arith.constant 0 : i32
    return %c0_i32, %c0_i32_0 : i32, i32
  }
  func.func @transform_3(%arg0: i32, %arg1: memref<1xi32, #tpu.memory_space<smem>>) -> (i32, i32) {
    %c0_i32 = arith.constant 0 : i32
    %c0_i32_0 = arith.constant 0 : i32
    %c0_i32_1 = arith.constant 0 : i32
    return %c0_i32, %c0_i32_0 : i32, i32
  }
  func.func @transform_4(%arg0: i32, %arg1: memref<1xi32, #tpu.memory_space<smem>>) -> (i32, i32, i32) {
    %c0_i32 = arith.constant 0 : i32
    %c0_i32_0 = arith.constant 0 : i32
    %c0_i32_1 = arith.constant 0 : i32
    return %arg0, %c0_i32, %c0_i32_0 : i32, i32, i32
  }
}

</mosaic_0001>

<llo_original>
// kernel: tpu_custom_call.1
$region0: #{tpu_custom_call.1}
  #allocation0 [shape = 'u32[]', space=smem, size = 0x4, offset = 0x4, fixed_abs, tag = 'smem constant byte address 0x4 - core index']
  #allocation1 [shape = 'u32[144,128]{1,0:T(1,128)}', space=vmem, size = 0x12000, scoped, tag = 'internal scratch']
  #allocation2 [shape = 'f32[1,128]{1,0:T(1,128)}', space=vmem, size = 0x200, scoped, tag = 'scratch operand']
  #allocation3 [shape = 's32[1]{0}', space=sflag, size = 0x4, scoped, tag = 'scoped memory for tpu_custom_call.1']
  #allocation4 [shape = 's32[1]{0:T(128)S(6)}', space=smem, size = 0x200, scoped, tag = 'prefetched SMEM operand 0']
  %s0 = inlined_call_operand.<no memory space> [shape: s32[1], index: 0, kind: input, shape index: {}]
  %s1 = inlined_call_operand.hbm [shape: f32[16,1,128], index: 1, kind: input, shape index: {}]
  %s2 = inlined_call_operand.vmem [shape: f32[1,128], index: 2, kind: input, shape index: {}]
  %s3 = inlined_call_operand.hbm [shape: f32[256,512], index: 3, kind: input, shape index: {}]
  %s4 = inlined_call_operand.vmem [shape: f32[1,512], index: 4, kind: input, shape index: {}]
  %s5 = inlined_call_operand.hbm [shape: f32[1,1,128], index: 5, kind: output, shape index: {}]
  %s6 = sld [smem:[#allocation0]]
  $region38: #{tpu_custom_call.1} parent=0
    _
  %s8 = ssub.s32 1, %s6
  %s9 = scalar_select 0, %s8, %s6
  %10 = sst [smem:[#allocation4]] %s0
  $region1: #{tpu_custom_call.1} parent=0
    #allocation5 [shape = 'u8[512]{0}', space=vmem, size = 0x400, scoped, tag = 'input window, operand 1, single buffered']
    #allocation6 [shape = 's32[1]{0}', space=sflag, size = 0x4, scoped, tag = 'scoped memory for tpu_custom_call.1']
    #allocation7 [shape = 's32[1]{0}', space=sflag, size = 0x4, scoped, tag = 'scoped memory for tpu_custom_call.1']
    #allocation8 [shape = 'u8[524288]{0}', space=vmem, size = 0x80000, scoped, tag = 'input window, operand 3, single buffered']
    #allocation9 [shape = 's32[1]{0}', space=sflag, size = 0x4, scoped, tag = 'scoped memory for tpu_custom_call.1']
    #allocation10 [shape = 'u8[512]{0}', space=vmem, size = 0x400, scoped, tag = 'output window, operand 0, single buffered']
    %11 = vsyncpa [#allocation6], 0
    %12 = vsyncpa [#allocation9], 0
    %13 = vsyncpa [#allocation7], 0
    // Predicated region
    $region2: #{tpu_custom_call.1} parent=1 // pred_check
      _
    $region3: #{tpu_custom_call.1} parent=1 // pred_check_branch
      %15 = sbr.rel (0) target = $region5
    $region4: #{tpu_custom_call.1} parent=1 // pred_region
      %s16 = sld [smem:[#allocation4]]
      %s18 = ssub.s32 16, 16
      %19 = vsyncadd [#allocation6], %s18
      %s20 = smul.addr %s16, 16
      %s21 = scalar_lea.hbm %s1, %s20
      %s23 = sshll.u32 [#allocation5], 4
      %s24 = int_to_ptr.vmem [resolvable:$true] %s23
      %26 = dma.hbm_to_vmem [thread:$0]  %s21, 16, %s24, [#allocation6]
    $region5: #{tpu_custom_call.1} parent=1 // pred_fallthru
      _
    // Predicated region
    $region6: #{tpu_custom_call.1} parent=1 // pred_check
      _
    $region7: #{tpu_custom_call.1} parent=1 // pred_check_branch
      %28 = sbr.rel (0) target = $region9
    $region8: #{tpu_custom_call.1} parent=1 // pred_region
      _
    $region9: #{tpu_custom_call.1} parent=1 // pred_fallthru
      _
    // Predicated region
    $region10: #{tpu_custom_call.1} parent=1 // pred_check
      _
    $region11: #{tpu_custom_call.1} parent=1 // pred_check_branch
      %30 = sbr.rel (0) target = $region13
    $region12: #{tpu_custom_call.1} parent=1 // pred_region
      %s32 = ssub.s32 16384, 16384
      %33 = vsyncadd [#allocation9], %s32
      %s34 = sshll.u32 [#allocation8], 4
      %s35 = int_to_ptr.vmem [resolvable:$true] %s34
      %40 = dma.hbm_to_vmem [thread:$0]  %s3, 16384, %s35, [#allocation9], 512, 512, 32
    $region13: #{tpu_custom_call.1} parent=1 // pred_fallthru
      _
    // Predicated region
    $region14: #{tpu_custom_call.1} parent=1 // pred_check
      _
    $region15: #{tpu_custom_call.1} parent=1 // pred_check_branch
      %42 = sbr.rel (0) target = $region17
    $region16: #{tpu_custom_call.1} parent=1 // pred_region
      _
    $region17: #{tpu_custom_call.1} parent=1 // pred_fallthru
      _
    // Predicated region
    $region18: #{tpu_custom_call.1} parent=1 // pred_check
      _
    $region19: #{tpu_custom_call.1} parent=1 // pred_check_branch
      %44 = sbr.rel (0) target = $region21
    $region20: #{tpu_custom_call.1} parent=1 // pred_region
      %45 = dma.done [#allocation6], 16
    $region21: #{tpu_custom_call.1} parent=1 // pred_fallthru
      _
    // Predicated region
    $region22: #{tpu_custom_call.1} parent=1 // pred_check
      _
    $region23: #{tpu_custom_call.1} parent=1 // pred_check_branch
      %47 = sbr.rel (0) target = $region25
    $region24: #{tpu_custom_call.1} parent=1 // pred_region
      %48 = dma.done [#allocation9], 16384
    $region25: #{tpu_custom_call.1} parent=1 // pred_fallthru
      _
    %s49 = sld [smem:[#allocation4]]
    %p50 = scmp.eq.s32.totalorder 0, 0
    // Predicated region
    $region26: #{tpu_custom_call.1} parent=1 // pred_check
      %p51 = pneg %p50
    $region27: #{tpu_custom_call.1} parent=1 // pred_check_branch
      %53 = sbr.rel (%p51) target = $region29
    $region28: #{tpu_custom_call.1} parent=1 // pred_region
      %v54 = vld [vmem:[%s2] sm:$0x1]
      %55 = vst [vmem:[#allocation2] sm:$0x1] %v54
    $region29: #{tpu_custom_call.1} parent=1 // pred_fallthru
      _
    %v56 = vld [vmem:[#allocation5] sm:$0x1]
    %v57 = vld [vmem:[#allocation2] sm:$0x1]
    %v58 = vld [vmem:[#allocation8] sm:$0xff]
    %v59 = vld [vmem:[#allocation8 + $0x8] sm:$0xff]
    %v60 = vld [vmem:[#allocation8 + $0x10] sm:$0xff]
    %v61 = vld [vmem:[#allocation8 + $0x18] sm:$0xff]
    %v62 = vld [vmem:[#allocation8 + $0x20] sm:$0xff]
    %v63 = vld [vmem:[#allocation8 + $0x28] sm:$0xff]
    %v64 = vld [vmem:[#allocation8 + $0x30] sm:$0xff]
    %v65 = vld [vmem:[#allocation8 + $0x38] sm:$0xff]
    %v66 = vld [vmem:[#allocation8 + $0x40] sm:$0xff]
    %v67 = vld [vmem:[#allocation8 + $0x48] sm:$0xff]
    %v68 = vld [vmem:[#allocation8 + $0x50] sm:$0xff]
    %v69 = vld [vmem:[#allocation8 + $0x58] sm:$0xff]
    %v70 = vld [vmem:[#allocation8 + $0x60] sm:$0xff]
    %v71 = vld [vmem:[#allocation8 + $0x68] sm:$0xff]
    %v72 = vld [vmem:[#allocation8 + $0x70] sm:$0xff]
    %v73 = vld [vmem:[#allocation8 + $0x78] sm:$0xff]
    %v74 = vld [vmem:[#allocation8 + $0x80] sm:$0xff]
    %v75 = vld [vmem:[#allocation8 + $0x88] sm:$0xff]
    %v76 = vld [vmem:[#allocation8 + $0x90] sm:$0xff]
    %v77 = vld [vmem:[#allocation8 + $0x98] sm:$0xff]
    %v78 = vld [vmem:[#allocation8 + $0xa0] sm:$0xff]
    %v79 = vld [vmem:[#allocation8 + $0xa8] sm:$0xff]
    %v80 = vld [vmem:[#allocation8 + $0xb0] sm:$0xff]
    %v81 = vld [vmem:[#allocation8 + $0xb8] sm:$0xff]
    %v82 = vld [vmem:[#allocation8 + $0xc0] sm:$0xff]
    %v83 = vld [vmem:[#allocation8 + $0xc8] sm:$0xff]
    %v84 = vld [vmem:[#allocation8 + $0xd0] sm:$0xff]
    %v85 = vld [vmem:[#allocation8 + $0xd8] sm:$0xff]
    %v86 = vld [vmem:[#allocation8 + $0xe0] sm:$0xff]
    %v87 = vld [vmem:[#allocation8 + $0xe8] sm:$0xff]
    %v88 = vld [vmem:[#allocation8 + $0xf0] sm:$0xff]
    %v89 = vld [vmem:[#allocation8 + $0xf8] sm:$0xff]
    %v90 = vld [vmem:[#allocation8 + $0x100] sm:$0xff]
    %v91 = vld [vmem:[#allocation8 + $0x108] sm:$0xff]
    %v92 = vld [vmem:[#allocation8 + $0x110] sm:$0xff]
    %v93 = vld [vmem:[#allocation8 + $0x118] sm:$0xff]
    %v94 = vld [vmem:[#allocation8 + $0x120] sm:$0xff]
    %v95 = vld [vmem:[#allocation8 + $0x128] sm:$0xff]
    %v96 = vld [vmem:[#allocation8 + $0x130] sm:$0xff]
    %v97 = vld [vmem:[#allocation8 + $0x138] sm:$0xff]
    %v98 = vld [vmem:[#allocation8 + $0x140] sm:$0xff]
    %v99 = vld [vmem:[#allocation8 + $0x148] sm:$0xff]
    %v100 = vld [vmem:[#allocation8 + $0x150] sm:$0xff]
    %v101 = vld [vmem:[#allocation8 + $0x158] sm:$0xff]
    %v102 = vld [vmem:[#allocation8 + $0x160] sm:$0xff]
    %v103 = vld [vmem:[#allocation8 + $0x168] sm:$0xff]
    %v104 = vld [vmem:[#allocation8 + $0x170] sm:$0xff]
    %v105 = vld [vmem:[#allocation8 + $0x178] sm:$0xff]
    %v106 = vld [vmem:[#allocation8 + $0x180] sm:$0xff]
    %v107 = vld [vmem:[#allocation8 + $0x188] sm:$0xff]
    %v108 = vld [vmem:[#allocation8 + $0x190] sm:$0xff]
    %v109 = vld [vmem:[#allocation8 + $0x198] sm:$0xff]
    %v110 = vld [vmem:[#allocation8 + $0x1a0] sm:$0xff]
    %v111 = vld [vmem:[#allocation8 + $0x1a8] sm:$0xff]
    %v112 = vld [vmem:[#allocation8 + $0x1b0] sm:$0xff]
    %v113 = vld [vmem:[#allocation8 + $0x1b8] sm:$0xff]
    %v114 = vld [vmem:[#allocation8 + $0x1c0] sm:$0xff]
    %v115 = vld [vmem:[#allocation8 + $0x1c8] sm:$0xff]
    %v116 = vld [vmem:[#allocation8 + $0x1d0] sm:$0xff]
    %v117 = vld [vmem:[#allocation8 + $0x1d8] sm:$0xff]
    %v118 = vld [vmem:[#allocation8 + $0x1e0] sm:$0xff]
    %v119 = vld [vmem:[#allocation8 + $0x1e8] sm:$0xff]
    %v120 = vld [vmem:[#allocation8 + $0x1f0] sm:$0xff]
    %v121 = vld [vmem:[#allocation8 + $0x1f8] sm:$0xff]
    %v122 = vld [vmem:[#allocation8 + $0x200] sm:$0xff]
    %v123 = vld [vmem:[#allocation8 + $0x208] sm:$0xff]
    %v124 = vld [vmem:[#allocation8 + $0x210] sm:$0xff]
    %v125 = vld [vmem:[#allocation8 + $0x218] sm:$0xff]
    %v126 = vld [vmem:[#allocation8 + $0x220] sm:$0xff]
    %v127 = vld [vmem:[#allocation8 + $0x228] sm:$0xff]
    %v128 = vld [vmem:[#allocation8 + $0x230] sm:$0xff]
    %v129 = vld [vmem:[#allocation8 + $0x238] sm:$0xff]
    %v130 = vld [vmem:[#allocation8 + $0x240] sm:$0xff]
    %v131 = vld [vmem:[#allocation8 + $0x248] sm:$0xff]
    %v132 = vld [vmem:[#allocation8 + $0x250] sm:$0xff]
    %v133 = vld [vmem:[#allocation8 + $0x258] sm:$0xff]
    %v134 = vld [vmem:[#allocation8 + $0x260] sm:$0xff]
    %v135 = vld [vmem:[#allocation8 + $0x268] sm:$0xff]
    %v136 = vld [vmem:[#allocation8 + $0x270] sm:$0xff]
    %v137 = vld [vmem:[#allocation8 + $0x278] sm:$0xff]
    %v138 = vld [vmem:[#allocation8 + $0x280] sm:$0xff]
    %v139 = vld [vmem:[#allocation8 + $0x288] sm:$0xff]
    %v140 = vld [vmem:[#allocation8 + $0x290] sm:$0xff]
    %v141 = vld [vmem:[#allocation8 + $0x298] sm:$0xff]
    %v142 = vld [vmem:[#allocation8 + $0x2a0] sm:$0xff]
    %v143 = vld [vmem:[#allocation8 + $0x2a8] sm:$0xff]
    %v144 = vld [vmem:[#allocation8 + $0x2b0] sm:$0xff]
    %v145 = vld [vmem:[#allocation8 + $0x2b8] sm:$0xff]
    %v146 = vld [vmem:[#allocation8 + $0x2c0] sm:$0xff]
    %v147 = vld [vmem:[#allocation8 + $0x2c8] sm:$0xff]
    %v148 = vld [vmem:[#allocation8 + $0x2d0] sm:$0xff]
    %v149 = vld [vmem:[#allocation8 + $0x2d8] sm:$0xff]
    %v150 = vld [vmem:[#allocation8 + $0x2e0] sm:$0xff]
    %v151 = vld [vmem:[#allocation8 + $0x2e8] sm:$0xff]
    %v152 = vld [vmem:[#allocation8 + $0x2f0] sm:$0xff]
    %v153 = vld [vmem:[#allocation8 + $0x2f8] sm:$0xff]
    %v154 = vld [vmem:[#allocation8 + $0x300] sm:$0xff]
    %v155 = vld [vmem:[#allocation8 + $0x308] sm:$0xff]
    %v156 = vld [vmem:[#allocation8 + $0x310] sm:$0xff]
    %v157 = vld [vmem:[#allocation8 + $0x318] sm:$0xff]
    %v158 = vld [vmem:[#allocation8 + $0x320] sm:$0xff]
    %v159 = vld [vmem:[#allocation8 + $0x328] sm:$0xff]
    %v160 = vld [vmem:[#allocation8 + $0x330] sm:$0xff]
    %v161 = vld [vmem:[#allocation8 + $0x338] sm:$0xff]
    %v162 = vld [vmem:[#allocation8 + $0x340] sm:$0xff]
    %v163 = vld [vmem:[#allocation8 + $0x348] sm:$0xff]
    %v164 = vld [vmem:[#allocation8 + $0x350] sm:$0xff]
    %v165 = vld [vmem:[#allocation8 + $0x358] sm:$0xff]
    %v166 = vld [vmem:[#allocation8 + $0x360] sm:$0xff]
    %v167 = vld [vmem:[#allocation8 + $0x368] sm:$0xff]
    %v168 = vld [vmem:[#allocation8 + $0x370] sm:$0xff]
    %v169 = vld [vmem:[#allocation8 + $0x378] sm:$0xff]
    %v170 = vld [vmem:[#allocation8 + $0x380] sm:$0xff]
    %v171 = vld [vmem:[#allocation8 + $0x388] sm:$0xff]
    %v172 = vld [vmem:[#allocation8 + $0x390] sm:$0xff]
    %v173 = vld [vmem:[#allocation8 + $0x398] sm:$0xff]
    %v174 = vld [vmem:[#allocation8 + $0x3a0] sm:$0xff]
    %v175 = vld [vmem:[#allocation8 + $0x3a8] sm:$0xff]
    %v176 = vld [vmem:[#allocation8 + $0x3b0] sm:$0xff]
    %v177 = vld [vmem:[#allocation8 + $0x3b8] sm:$0xff]
    %v178 = vld [vmem:[#allocation8 + $0x3c0] sm:$0xff]
    %v179 = vld [vmem:[#allocation8 + $0x3c8] sm:$0xff]
    %v180 = vld [vmem:[#allocation8 + $0x3d0] sm:$0xff]
    %v181 = vld [vmem:[#allocation8 + $0x3d8] sm:$0xff]
    %v182 = vld [vmem:[#allocation8 + $0x3e0] sm:$0xff]
    %v183 = vld [vmem:[#allocation8 + $0x3e8] sm:$0xff]
    %v184 = vld [vmem:[#allocation8 + $0x3f0] sm:$0xff]
    %v185 = vld [vmem:[#allocation8 + $0x3f8] sm:$0xff]
    %v186 = vld [vmem:[%s4] sm:$0xf]
    %v188 = vlaneseq
    %v189 = vshrl.u32 %v188, 7
    %v190 = vsub.s32 0, %v189
    %v191 = vrot.slane %v186, %v190
    %v192 = vlaneseq
    %v193 = vshrl.u32 %v192, 7
    %v194 = vsub.s32 1, %v193
    %v195 = vrot.slane %v186, %v194
    %v196 = vlaneseq
    %v197 = vshrl.u32 %v196, 7
    %v198 = vsub.s32 2, %v197
    %v199 = vrot.slane %v186, %v198
    %v200 = vlaneseq
    %v201 = vshrl.u32 %v200, 7
    %v202 = vsub.s32 3, %v201
    %v203 = vrot.slane %v186, %v202
    %208 = vmatprep.subr.mxu0 %v59
    %209 = vmatpush1.msra.mxu0 %v58
    %210 = vmatprep.subr.mxu0 %v63
    %211 = vmatpush1.msra.mxu0 %v62
    %212 = vmatprep.subr.mxu0 %v67
    %213 = vmatpush1.msra.mxu0 %v66
    %214 = vmatprep.subr.mxu0 %v71
    %215 = vmatpush1.msra.mxu0 %v70
    %216 = vmatprep.subr.mxu0 %v75
    %217 = vmatpush1.msra.mxu0 %v74
    %218 = vmatprep.subr.mxu0 %v79
    %219 = vmatpush1.msra.mxu0 %v78
    %220 = vmatprep.subr.mxu0 %v83
    %221 = vmatpush1.msra.mxu0 %v82
    %222 = vmatprep.subr.mxu0 %v87
    %223 = vmatpush1.msra.mxu0 %v86
    %224 = vmatprep.subr.mxu0 %v91
    %225 = vmatpush1.msra.mxu0 %v90
    %226 = vmatprep.subr.mxu0 %v95
    %227 = vmatpush1.msra.mxu0 %v94
    %228 = vmatprep.subr.mxu0 %v99
    %229 = vmatpush1.msra.mxu0 %v98
    %230 = vmatprep.subr.mxu0 %v103
    %231 = vmatpush1.msra.mxu0 %v102
    %232 = vmatprep.subr.mxu0 %v107
    %233 = vmatpush1.msra.mxu0 %v106
    %234 = vmatprep.subr.mxu0 %v111
    %235 = vmatpush1.msra.mxu0 %v110
    %236 = vmatprep.subr.mxu0 %v115
    %237 = vmatpush1.msra.mxu0 %v114
    %238 = vmatprep.subr.mxu0 %v119
    %239 = vmatpush1.msra.mxu0 %v118
    %240 = vmatprep.subr.mxu0 %v123
    %241 = vmatpush1.msra.mxu0 %v122
    %242 = vmatprep.subr.mxu0 %v127
    %243 = vmatpush1.msra.mxu0 %v126
    %244 = vmatprep.subr.mxu0 %v131
    %245 = vmatpush1.msra.mxu0 %v130
    %246 = vmatprep.subr.mxu0 %v135
    %247 = vmatpush1.msra.mxu0 %v134
    %248 = vmatprep.subr.mxu0 %v139
    %249 = vmatpush1.msra.mxu0 %v138
    %250 = vmatprep.subr.mxu0 %v143
    %251 = vmatpush1.msra.mxu0 %v142
    %252 = vmatprep.subr.mxu0 %v147
    %253 = vmatpush1.msra.mxu0 %v146
    %254 = vmatprep.subr.mxu0 %v151
    %255 = vmatpush1.msra.mxu0 %v150
    %256 = vmatprep.subr.mxu0 %v155
    %257 = vmatpush1.msra.mxu0 %v154
    %258 = vmatprep.subr.mxu0 %v159
    %259 = vmatpush1.msra.mxu0 %v158
    %260 = vmatprep.subr.mxu0 %v163
    %261 = vmatpush1.msra.mxu0 %v162
    %262 = vmatprep.subr.mxu0 %v167
    %263 = vmatpush1.msra.mxu0 %v166
    %264 = vmatprep.subr.mxu0 %v171
    %265 = vmatpush1.msra.mxu0 %v170
    %266 = vmatprep.subr.mxu0 %v175
    %267 = vmatpush1.msra.mxu0 %v174
    %268 = vmatprep.subr.mxu0 %v179
    %269 = vmatpush1.msra.mxu0 %v178
    %270 = vmatprep.subr.mxu0 %v183
    %271 = vmatpush1.msra.mxu0 %v182
    %272 = vmatprep.mubr.f32.mxu0 %v57
    %273 = vmatmul.mubr.f32.gmra.mrb[0].mxu0 %v56
    %v274 = vpop.f32.mrb[0].mxu0
    %v275 = vadd.f32 %v191, %v274
    %v276 = vpop.f32.mrb[0].mxu0
    %v277 = vadd.f32 %v195, %v276
    %278 = vdwg.mxu0
    %279 = vmatprep.subr.mxu0 %v61
    %280 = vmatpush1.msra.mxu0 %v60
    %281 = vmatprep.subr.mxu0 %v65
    %282 = vmatpush1.msra.mxu0 %v64
    %283 = vmatprep.subr.mxu0 %v69
    %284 = vmatpush1.msra.mxu0 %v68
    %285 = vmatprep.subr.mxu0 %v73
    %286 = vmatpush1.msra.mxu0 %v72
    %287 = vmatprep.subr.mxu0 %v77
    %288 = vmatpush1.msra.mxu0 %v76
    %289 = vmatprep.subr.mxu0 %v81
    %290 = vmatpush1.msra.mxu0 %v80
    %291 = vmatprep.subr.mxu0 %v85
    %292 = vmatpush1.msra.mxu0 %v84
    %293 = vmatprep.subr.mxu0 %v89
    %294 = vmatpush1.msra.mxu0 %v88
    %295 = vmatprep.subr.mxu0 %v93
    %296 = vmatpush1.msra.mxu0 %v92
    %297 = vmatprep.subr.mxu0 %v97
    %298 = vmatpush1.msra.mxu0 %v96
    %299 = vmatprep.subr.mxu0 %v101
    %300 = vmatpush1.msra.mxu0 %v100
    %301 = vmatprep.subr.mxu0 %v105
    %302 = vmatpush1.msra.mxu0 %v104
    %303 = vmatprep.subr.mxu0 %v109
    %304 = vmatpush1.msra.mxu0 %v108
    %305 = vmatprep.subr.mxu0 %v113
    %306 = vmatpush1.msra.mxu0 %v112
    %307 = vmatprep.subr.mxu0 %v117
    %308 = vmatpush1.msra.mxu0 %v116
    %309 = vmatprep.subr.mxu0 %v121
    %310 = vmatpush1.msra.mxu0 %v120
    %311 = vmatprep.subr.mxu0 %v125
    %312 = vmatpush1.msra.mxu0 %v124
    %313 = vmatprep.subr.mxu0 %v129
    %314 = vmatpush1.msra.mxu0 %v128
    %315 = vmatprep.subr.mxu0 %v133
    %316 = vmatpush1.msra.mxu0 %v132
    %317 = vmatprep.subr.mxu0 %v137
    %318 = vmatpush1.msra.mxu0 %v136
    %319 = vmatprep.subr.mxu0 %v141
    %320 = vmatpush1.msra.mxu0 %v140
    %321 = vmatprep.subr.mxu0 %v145
    %322 = vmatpush1.msra.mxu0 %v144
    %323 = vmatprep.subr.mxu0 %v149
    %324 = vmatpush1.msra.mxu0 %v148
    %325 = vmatprep.subr.mxu0 %v153
    %326 = vmatpush1.msra.mxu0 %v152
    %327 = vmatprep.subr.mxu0 %v157
    %328 = vmatpush1.msra.mxu0 %v156
    %329 = vmatprep.subr.mxu0 %v161
    %330 = vmatpush1.msra.mxu0 %v160
    %331 = vmatprep.subr.mxu0 %v165
    %332 = vmatpush1.msra.mxu0 %v164
    %333 = vmatprep.subr.mxu0 %v169
    %334 = vmatpush1.msra.mxu0 %v168
    %335 = vmatprep.subr.mxu0 %v173
    %336 = vmatpush1.msra.mxu0 %v172
    %337 = vmatprep.subr.mxu0 %v177
    %338 = vmatpush1.msra.mxu0 %v176
    %339 = vmatprep.subr.mxu0 %v181
    %340 = vmatpush1.msra.mxu0 %v180
    %341 = vmatprep.subr.mxu0 %v185
    %342 = vmatpush1.msra.mxu0 %v184
    %343 = vmatprep.mubr.f32.mxu0 %v57
    %344 = vmatmul.mubr.f32.gmra.mrb[0].mxu0 %v56
    %v345 = vpop.f32.mrb[0].mxu0
    %v346 = vadd.f32 %v199, %v345
    %v347 = vpop.f32.mrb[0].mxu0
    %v348 = vadd.f32 %v203, %v347
    %349 = vdwg.mxu0
    %v350 = vxor.u32 %v275, 2147483648
    %v351 = vmul.f32 %v350, 1.442695
    %v352 = vpow.pop %v351
    %v353 = vadd.f32 %v352, 1.0
    %v354 = vrcp.pop %v353
    %v355 = vmul.f32 1.0, %v354
    %v356 = vxor.u32 %v277, 2147483648
    %v357 = vmul.f32 %v356, 1.442695
    %v358 = vpow.pop %v357
    %v359 = vadd.f32 %v358, 1.0
    %v360 = vrcp.pop %v359
    %v361 = vmul.f32 1.0, %v360
    %v362 = vmul.f32 %v355, %v348
    %v363 = vadd.f32 %v346, %v362
    %v364 = vtanh.pop %v363
    %v365 = vsub.f32 1.0, %v361
    %v366 = vmul.f32 %v365, %v364
    %v367 = vmul.f32 %v361, %v57
    %v368 = vadd.f32 %v366, %v367
    %369 = vst [vmem:[#allocation2] sm:$0x1] %v368
    %370 = vst [vmem:[#allocation10] sm:$0x1] %v368
    // Predicated region
    $region30: #{tpu_custom_call.1} parent=1 // pred_check
      _
    $region31: #{tpu_custom_call.1} parent=1 // pred_check_branch
      %372 = sbr.rel (0) target = $region33
    $region32: #{tpu_custom_call.1} parent=1 // pred_region
      %s374 = ssub.s32 16, 16
      %375 = vsyncadd [#allocation7], %s374
      %s377 = sshll.u32 [#allocation10], 4
      %s378 = int_to_ptr.vmem [resolvable:$true] %s377
      %380 = dma.vmem_to_hbm [thread:$0]  %s378, 16, %s5, [#allocation7]
    $region33: #{tpu_custom_call.1} parent=1 // pred_fallthru
      _
    // Predicated region
    $region34: #{tpu_custom_call.1} parent=1 // pred_check
      _
    $region35: #{tpu_custom_call.1} parent=1 // pred_check_branch
      %382 = sbr.rel (0) target = $region37
    $region36: #{tpu_custom_call.1} parent=1 // pred_region
      %383 = dma.done [#allocation7], 16
    $region37: #{tpu_custom_call.1} parent=1 // pred_fallthru
      _
    %384 = vsyncpa [#allocation6], 1
    %385 = vsyncpa [#allocation9], 1
    %386 = vsyncpa [#allocation7], 1

</llo_original>
